<compile_context>
chip_gen: v6e
topology: v6e:2x2x1
jax: 0.10.0
libtpu: 0.0.40
codegen_flags: <defaults>
</compile_context>

<pallas_src>
import functools

import jax
import jax.numpy as jnp
from jax.experimental import pallas as pl
from jax.experimental.pallas import tpu as pltpu


# --------------------------------------------------------------------------- #
# Small helpers
# --------------------------------------------------------------------------- #
def _round_up(n, m):
    return ((n + m - 1) // m) * m


def _pad2(a, rows, cols):
    return jnp.pad(a, ((0, rows - a.shape[0]), (0, cols - a.shape[1])))


def _bias_row(vec, width):
    """One bias vector stored in its own 8-row (sublane-aligned) group."""
    r = jnp.zeros((8, width), jnp.float32)
    return r.at[0, : vec.shape[0]].set(vec.astype(jnp.float32))


def _plan_batch(B, sub_tile=512, max_block=2048, min_steps=2):
    """Pick (padded_batch, rows_per_grid_step, rows_per_inner_sub_chunk).

    Goals: small padding waste, >=2 grid steps when possible (v7x megacore),
    large per-step blocks (amortise ~0.35us/step pipeline overhead), sub-chunks
    capped at `sub_tile` rows so f32 intermediates stay comfortably in vregs/VMEM.
    """
    b8 = _round_up(max(B, 1), 8)
    cands = list(range(64, min(sub_tile, b8) + 1, 64)) or [b8]

    def waste(s):
        return (-b8) % s

    ok = [s for s in cands if waste(s) * 8 <= b8]          # <=12.5% padding waste
    sub = max(ok) if ok else min(cands, key=lambda s: (waste(s), -s))
    b_pad = _round_up(b8, sub)
    n_sub = b_pad // sub
    max_per = max(1, max_block // sub)
    per = 1
    for c in range(min(max_per, n_sub), 0, -1):
        if n_sub % c == 0 and (n_sub // c >= min_steps or c == n_sub == 1):
            per = c
            break
    return b_pad, per * sub, sub


# --------------------------------------------------------------------------- #
# One-time parameter packing (hoisted out of the hot path)
# --------------------------------------------------------------------------- #
def prepare_vae_params(params, d_z, compute_dtype=jnp.bfloat16):
    """Pack / pad / pre-cast PyTorch-shaped weights into three kernel operands."""
    f32 = jnp.float32
    W1, b1 = params["enc_w1"], params["enc_b1"]          # (H, D_in), (H,)
    W2, b2 = params["enc_w2"], params["enc_b2"]          # (2*d_z, H), (2*d_z,)
    V1, c1 = params["dec_w1"], params["dec_b1"]          # (H, d_z), (H,)
    V2, c2 = params["dec_w2"], params["dec_b2"]          # (D_out, H), (D_out,)
    H, D_in = W1.shape
    D_out = V2.shape[0]
    assert W2.shape[0] == 2 * d_z and V1.shape[1] == d_z

    h_p = _round_up(H, 8)
    d_in_p = _round_up(D_in, 8)
    dz2 = 2 * d_z

    # wa: rows [0:d_in_p] = W1^T (encoder L1), rows [d_in_p:d_in_p+2*d_z] = [V1^T ; V1^T]
    w1t = _pad2(W1.T.astype(f32), d_in_p, h_p)
    v1t = _pad2(V1.T.astype(f32), d_z, h_p)
    wa = jnp.concatenate([w1t, v1t, v1t], axis=0).astype(compute_dtype)

    # wb: rows [0:h_p] = W2^T  (columns = [mu | logvar]),  rows [h_p:2h_p] = V2^T
    wcol = max(dz2, D_out)
    w2t = _pad2(W2.T.astype(f32), h_p, wcol)
    v2t = _pad2(V2.T.astype(f32), h_p, wcol)
    wb = jnp.concatenate([w2t, v2t], axis=0).astype(compute_dtype)

    # biases + mu-lane mask, one per 8-row (sublane-aligned) group, f32
    wbias = max(h_p, dz2, D_out)
    mask_mu = jnp.concatenate([jnp.ones((d_z,), f32), jnp.zeros((d_z,), f32)])
    bias = jnp.concatenate([
        _bias_row(b1, wbias),        # rows  0..7  : encoder L1 bias
        _bias_row(b2, wbias),        # rows  8..15 : encoder L2 bias ([mu | logvar])
        _bias_row(c1, wbias),        # rows 16..23 : decoder L1 bias
        _bias_row(c2, wbias),        # rows 24..31 : decoder L2 bias
        _bias_row(mask_mu, wbias),   # rows 32..39 : 1.0 on mu lanes, 0.0 on logvar lanes
    ], axis=0)

    return {
        "wa": wa, "wb": wb, "bias": bias,
        "dims": (D_in, d_in_p, h_p, d_z, D_out),
        "compute_dtype": compute_dtype,
    }


# --------------------------------------------------------------------------- #
# Kernel
# --------------------------------------------------------------------------- #
def _vae_kernel(dims, n_sub, sub, compute_dtype,
                x_ref, eps_ref, wa_ref, wb_ref, b_ref, out_ref):
    """(batch, feature) tiles; batch on the sublane axis; 4 canonical matmuls."""
    d_in_p, h_p, d_z, d_out = dims
    dz2 = 2 * d_z
    cdt = compute_dtype

    # Packed weights (already compute dtype). All slice offsets are static,
    # 8-aligned on the sublane axis and offset-0 (prefix) on the lane axis.
    w1t = wa_ref[0:d_in_p, :]                     # (d_in_p, h_p)   encoder L1 (transposed)
    v1t2 = wa_ref[d_in_p:d_in_p + dz2, :]         # (2*d_z, h_p)    [dec W1^T ; dec W1^T]
    w2t = wb_ref[0:h_p, 0:dz2]                    # (h_p, 2*d_z)    encoder L2 ([mu | logvar])
    v2t = wb_ref[h_p:2 * h_p, 0:d_out]            # (h_p, d_out)    decoder L2

    b1 = b_ref[0:1, 0:h_p]
    b2 = b_ref[8:9, 0:dz2]
    c1 = b_ref[16:17, 0:h_p]
    c2 = b_ref[24:25, 0:d_out]
    m_mu = b_ref[32:33, 0:dz2]                    # 1.0 on mu lanes, 0.0 on logvar lanes
    m_big = 1e4 * m_mu                            # hoisted: kills exp() on the mu lanes

    for s in range(n_sub):                        # static inner loop over row sub-chunks
        r0 = s * sub
        x = x_ref[r0:r0 + sub, :]                                   # (sub, d_in_p) cdt

        # ---- encoder ----
        h1 = jnp.dot(x, w1t, preferred_element_type=jnp.float32) + b1
        h1 = jnp.maximum(h1, 0.0)                                   # (sub, h_p) f32
        enc = jnp.dot(h1.astype(cdt), w2t,
                      preferred_element_type=jnp.float32) + b2      # (sub, 2*d_z) = [mu|logvar]

        # ---- reparameterisation (fused, no cross-lane movement) ----
        eps2 = eps_ref[r0:r0 + sub, :]            # f32; eps on the logvar lanes, 0 elsewhere
        std = jnp.exp(enc * 0.5 - m_big)          # exp(-1e4) == 0 on mu lanes (no inf/NaN)
        v = enc * m_mu + eps2 * std               # = [mu | eps * exp(logvar/2)]

        # ---- decoder: v @ [V1^T ; V1^T] == (mu + eps*std) @ V1^T ----
        g1 = jnp.dot(v.astype(cdt), v1t2, preferred_element_type=jnp.float32) + c1
        g1 = jnp.maximum(g1, 0.0)                                   # (sub, h_p) f32
        xh = jnp.dot(g1.astype(cdt), v2t, preferred_element_type=jnp.float32) + c2

        out_ref[r0:r0 + sub, :] = xh                                # (sub, d_out) f32


# --------------------------------------------------------------------------- #
# Hot-path wrapper
# --------------------------------------------------------------------------- #
def vae_forward(x, eps, packed, *, sub_tile=512, max_block=2048):
    """x: (B, D_in) f32, eps: (B, d_z) f32, packed: output of prepare_vae_params."""
    d_in, d_in_p, h_p, d_z, d_out = packed["dims"]
    cdt = packed["compute_dtype"]
    B = x.shape[0]
    assert x.shape[1] == d_in and eps.shape[1] == d_z
    dz2 = 2 * d_z

    b_pad, nb, sub = _plan_batch(B, sub_tile, max_block)
    grid = (b_pad // nb,)
    n_sub = nb // sub

    # Only the batch dimension is padded; the tiny feature pads are fused into the
    # same single op.  x is pre-cast to the compute dtype (halves its DMA).
    x_p = jnp.pad(x.astype(cdt), ((0, b_pad - B), (0, d_in_p - d_in)))
    # eps lands on the logvar lanes (columns [d_z : 2*d_z)); zeros on the mu lanes.
    eps_p = jnp.pad(eps.astype(jnp.float32), ((0, b_pad - B), (d_z, 0)))

    kernel = functools.partial(_vae_kernel, (d_in_p, h_p, d_z, d_out), n_sub, sub, cdt)

    out = pl.pallas_call(
        kernel,
        out_shape=jax.ShapeDtypeStruct((b_pad, d_out), jnp.float32),
        grid=grid,
        in_specs=[
            pl.BlockSpec((nb, d_in_p), lambda i: (i, 0)),            # x rows
            pl.BlockSpec((nb, dz2), lambda i: (i, 0)),               # eps rows
            pl.BlockSpec(packed["wa"].shape, lambda i: (0, 0)),      # weights: VMEM-resident
            pl.BlockSpec(packed["wb"].shape, lambda i: (0, 0)),
            pl.BlockSpec(packed["bias"].shape, lambda i: (0, 0)),
        ],
        out_specs=pl.BlockSpec((nb, d_out), lambda i: (i, 0)),
        compiler_params=pltpu.CompilerParams(
            dimension_semantics=("parallel",),       # v7x: shard the batch grid over 2 TCs
        ),
    )(x_p, eps_p, packed["wa"], packed["wb"], packed["bias"])

    return out[:B]                                                   # (B, D_out)


# --------------------------------------------------------------------------- #
# Pure-JAX references
# --------------------------------------------------------------------------- #
def vae_reference(x, eps, params):
    """Full-f32 reference (module semantics)."""
    P = jax.lax.Precision.HIGHEST
    mm = lambda a, b: jnp.matmul(a, b, precision=P)
    h1 = jnp.maximum(mm(x, params["enc_w1"].T) + params["enc_b1"], 0.0)
    enc = mm(h1, params["enc_w2"].T) + params["enc_b2"]
    d_z = eps.shape[1]
    mu, logvar = enc[:, :d_z], enc[:, d_z:]
    z = mu + eps * jnp.exp(logvar / 2)
    g1 = jnp.maximum(mm(z, params["dec_w1"].T) + params["dec_b1"], 0.0)
    return mm(g1, params["dec_w2"].T) + params["dec_b2"]


def vae_reference_mixed(x, eps, params):
    """Mirrors the kernel: bf16 matmul operands, f32 accumulation, split decoder-L1 sum."""
    bf = jnp.bfloat16
    def mm(a, b):
        return jnp.matmul(a.astype(bf), b.astype(bf), preferred_element_type=jnp.float32)
    h1 = jnp.maximum(mm(x, params["enc_w1"].T) + params["enc_b1"], 0.0)
    enc = mm(h1, params["enc_w2"].T) + params["enc_b2"]
    d_z = eps.shape[1]
    mu, logvar = enc[:, :d_z], enc[:, d_z:]
    w = eps * jnp.exp(logvar / 2)
    g1 = jnp.maximum(mm(mu, params["dec_w1"].T) + mm(w, params["dec_w1"].T)
                     + params["dec_b1"], 0.0)
    return mm(g1, params["dec_w2"].T) + params["dec_b2"]


# --------------------------------------------------------------------------- #
# Demo / correctness check
# --------------------------------------------------------------------------- #
if __name__ == "__main__":
    # cartpole-ish VAE MLP: enc_layers=[(H, D_in), (2*d_z, H)], dec_layers=[(H, d_z), (D_out, H)]
    B, D_in, H, d_z, D_out = 200, 4, 32, 4, 4

    key = jax.random.PRNGKey(0)
    keys = jax.random.split(key, 12)

    # PyTorch Linear shapes: weight (out_f, in_f), bias (out_f,)
    params = {
        "enc_w1": 0.1 * jax.random.normal(keys[0], (H, D_in), jnp.float32),
        "enc_b1": 0.05 * jax.random.normal(keys[1], (H,), jnp.float32),
        "enc_w2": 0.1 * jax.random.normal(keys[2], (2 * d_z, H), jnp.float32),
        "enc_b2": 0.05 * jax.random.normal(keys[3], (2 * d_z,), jnp.float32),
        "dec_w1": 0.1 * jax.random.normal(keys[4], (H, d_z), jnp.float32),
        "dec_b1": 0.05 * jax.random.normal(keys[5], (H,), jnp.float32),
        "dec_w2": 0.1 * jax.random.normal(keys[6], (D_out, H), jnp.float32),
        "dec_b2": 0.05 * jax.random.normal(keys[7], (D_out,), jnp.float32),
    }

    packed = prepare_vae_params(params, d_z)          # one-time packing, out of the hot path

    # ---- run 1: small batch (padding path, 2 grid steps, 1 sub-chunk per step) ----
    x = jax.random.normal(keys[8], (B, D_in), jnp.float32)
    eps = jax.random.normal(keys[9], (B, d_z), jnp.float32)   # deterministic torch.randn stand-in
    out = jax.block_until_ready(vae_forward(x, eps, packed))
    assert out.shape == (B, D_out)

    ref_m = vae_reference_mixed(x, eps, params)
    ref_f = vae_reference(x, eps, params)
    assert jnp.allclose(out, ref_m, atol=5e-3, rtol=5e-3), \
        f"max |out-ref_mixed| = {float(jnp.max(jnp.abs(out - ref_m)))}"
    assert jnp.allclose(out, ref_f, atol=5e-2, rtol=5e-2), \
        f"max |out-ref_f32| = {float(jnp.max(jnp.abs(out - ref_f)))}"

    # ---- run 2: larger batch (2 grid steps x 2 inner sub-chunks of 512 rows) ----
    B2 = 2048
    x2 = jax.random.normal(keys[10], (B2, D_in), jnp.float32)
    eps2 = jax.random.normal(keys[11], (B2, d_z), jnp.float32)
    out2 = jax.block_until_ready(vae_forward(x2, eps2, packed))
    ref2 = vae_reference_mixed(x2, eps2, params)
    assert out2.shape == (B2, D_out)
    assert jnp.allclose(out2, ref2, atol=5e-3, rtol=5e-3), \
        f"max |out2-ref2| = {float(jnp.max(jnp.abs(out2 - ref2)))}"

    print("KERNEL_OK")
</pallas_src>

<mosaic_0001>
module attributes {stable_mosaic.version = 11 : i64} {
  func.func @_vae_kernel(%arg0: i32, %arg1: memref<128x8xbf16, #tpu.memory_space<vmem>>, %arg2: memref<128x8xf32, #tpu.memory_space<vmem>>, %arg3: memref<16x32xbf16, #tpu.memory_space<vmem>>, %arg4: memref<64x8xbf16, #tpu.memory_space<vmem>>, %arg5: memref<40x32xf32, #tpu.memory_space<vmem>>, %arg6: memref<128x4xf32, #tpu.memory_space<vmem>>) attributes {dimension_semantics = [#tpu.dimension_semantics<parallel>], iteration_bounds = array<i64: 2>, scalar_prefetch = 0 : i64, scratch_operands = 0 : i64, tpu.core_type = #tpu.core_type<tc>, window_params = [{transform_indices = @transform_0, window_bounds = array<i64: 128, 8>}, {transform_indices = @transform_1, window_bounds = array<i64: 128, 8>}, {pipeline_mode = #tpu.pipeline_mode<synchronous>, transform_indices = @transform_2, window_bounds = array<i64: 16, 32>}, {pipeline_mode = #tpu.pipeline_mode<synchronous>, transform_indices = @transform_3, window_bounds = array<i64: 64, 8>}, {pipeline_mode = #tpu.pipeline_mode<synchronous>, transform_indices = @transform_4, window_bounds = array<i64: 40, 32>}, {transform_indices = @transform_5, window_bounds = array<i64: 128, 4>}]} {
    %c0 = arith.constant 0 : index
    %c0_0 = arith.constant 0 : index
    %0 = vector.load %arg3[%c0, %c0_0] : memref<16x32xbf16, #tpu.memory_space<vmem>>, vector<8x32xbf16>
    %c8 = arith.constant 8 : index
    %c0_1 = arith.constant 0 : index
    %1 = vector.load %arg3[%c8, %c0_1] : memref<16x32xbf16, #tpu.memory_space<vmem>>, vector<8x32xbf16>
    %c0_2 = arith.constant 0 : index
    %c0_3 = arith.constant 0 : index
    %2 = vector.load %arg4[%c0_2, %c0_3] : memref<64x8xbf16, #tpu.memory_space<vmem>>, vector<32x8xbf16>
    %c32 = arith.constant 32 : index
    %c0_4 = arith.constant 0 : index
    %3 = vector.load %arg4[%c32, %c0_4] : memref<64x8xbf16, #tpu.memory_space<vmem>>, vector<32x4xbf16>
    %c0_5 = arith.constant 0 : index
    %c0_6 = arith.constant 0 : index
    %4 = vector.load %arg5[%c0_5, %c0_6] : memref<40x32xf32, #tpu.memory_space<vmem>>, vector<1x32xf32>
    %c8_7 = arith.constant 8 : index
    %c0_8 = arith.constant 0 : index
    %5 = vector.load %arg5[%c8_7, %c0_8] : memref<40x32xf32, #tpu.memory_space<vmem>>, vector<1x8xf32>
    %c16 = arith.constant 16 : index
    %c0_9 = arith.constant 0 : index
    %6 = vector.load %arg5[%c16, %c0_9] : memref<40x32xf32, #tpu.memory_space<vmem>>, vector<1x32xf32>
    %c24 = arith.constant 24 : index
    %c0_10 = arith.constant 0 : index
    %7 = vector.load %arg5[%c24, %c0_10] : memref<40x32xf32, #tpu.memory_space<vmem>>, vector<1x4xf32>
    %c32_11 = arith.constant 32 : index
    %c0_12 = arith.constant 0 : index
    %8 = vector.load %arg5[%c32_11, %c0_12] : memref<40x32xf32, #tpu.memory_space<vmem>>, vector<1x8xf32>
    %cst = arith.constant 1.000000e+04 : f32
    %9 = vector.broadcast %cst : f32 to vector<1x8xf32>
    %10 = arith.mulf %9, %8 : vector<1x8xf32>
    %c0_13 = arith.constant 0 : index
    %c0_14 = arith.constant 0 : index
    %11 = vector.load %arg1[%c0_13, %c0_14] : memref<128x8xbf16, #tpu.memory_space<vmem>>, vector<128x8xbf16>
    %cst_15 = arith.constant dense<0.000000e+00> : vector<128x32xf32>
    %12 = tpu.matmul %11, %0, %cst_15 {dimension_numbers = #tpu.dot_dimension_numbers<[1], [0], [0], [1], [0, 0, 1, 1], [], []>} : vector<128x8xbf16>, vector<8x32xbf16>, vector<128x32xf32> -> vector<128x32xf32>
    %13 = vector.broadcast %4 : vector<1x32xf32> to vector<128x32xf32>
    %14 = arith.addf %12, %13 : vector<128x32xf32>
    %cst_16 = arith.constant 0.000000e+00 : f32
    %15 = vector.broadcast %cst_16 : f32 to vector<128x32xf32>
    %16 = arith.maximumf %14, %15 : vector<128x32xf32>
    %17 = arith.truncf %16 : vector<128x32xf32> to vector<128x32xbf16>
    %cst_17 = arith.constant dense<0.000000e+00> : vector<128x8xf32>
    %18 = tpu.matmul %17, %2, %cst_17 {dimension_numbers = #tpu.dot_dimension_numbers<[1], [0], [0], [1], [0, 0, 1, 1], [], []>} : vector<128x32xbf16>, vector<32x8xbf16>, vector<128x8xf32> -> vector<128x8xf32>
    %19 = vector.broadcast %5 : vector<1x8xf32> to vector<128x8xf32>
    %20 = arith.addf %18, %19 : vector<128x8xf32>
    %c0_18 = arith.constant 0 : index
    %c0_19 = arith.constant 0 : index
    %21 = vector.load %arg2[%c0_18, %c0_19] : memref<128x8xf32, #tpu.memory_space<vmem>>, vector<128x8xf32>
    %cst_20 = arith.constant 5.000000e-01 : f32
    %22 = vector.broadcast %cst_20 : f32 to vector<128x8xf32>
    %23 = arith.mulf %20, %22 : vector<128x8xf32>
    %24 = vector.broadcast %10 : vector<1x8xf32> to vector<128x8xf32>
    %25 = arith.subf %23, %24 : vector<128x8xf32>
    %26 = math.exp %25 : vector<128x8xf32>
    %27 = vector.broadcast %8 : vector<1x8xf32> to vector<128x8xf32>
    %28 = arith.mulf %20, %27 : vector<128x8xf32>
    %29 = arith.mulf %21, %26 : vector<128x8xf32>
    %30 = arith.addf %28, %29 : vector<128x8xf32>
    %31 = arith.truncf %30 : vector<128x8xf32> to vector<128x8xbf16>
    %cst_21 = arith.constant dense<0.000000e+00> : vector<128x32xf32>
    %32 = tpu.matmul %31, %1, %cst_21 {dimension_numbers = #tpu.dot_dimension_numbers<[1], [0], [0], [1], [0, 0, 1, 1], [], []>} : vector<128x8xbf16>, vector<8x32xbf16>, vector<128x32xf32> -> vector<128x32xf32>
    %33 = vector.broadcast %6 : vector<1x32xf32> to vector<128x32xf32>
    %34 = arith.addf %32, %33 : vector<128x32xf32>
    %cst_22 = arith.constant 0.000000e+00 : f32
    %35 = vector.broadcast %cst_22 : f32 to vector<128x32xf32>
    %36 = arith.maximumf %34, %35 : vector<128x32xf32>
    %37 = arith.truncf %36 : vector<128x32xf32> to vector<128x32xbf16>
    %cst_23 = arith.constant dense<0.000000e+00> : vector<128x4xf32>
    %38 = tpu.matmul %37, %3, %cst_23 {dimension_numbers = #tpu.dot_dimension_numbers<[1], [0], [0], [1], [0, 0, 1, 1], [], []>} : vector<128x32xbf16>, vector<32x4xbf16>, vector<128x4xf32> -> vector<128x4xf32>
    %39 = vector.broadcast %7 : vector<1x4xf32> to vector<128x4xf32>
    %40 = arith.addf %38, %39 : vector<128x4xf32>
    %c0_24 = arith.constant 0 : index
    %c0_25 = arith.constant 0 : index
    %41 = vector.load %arg6[%c0_24, %c0_25] : memref<128x4xf32, #tpu.memory_space<vmem>>, vector<128x4xf32>
    tpu.vector_store %arg6[%c0_24, %c0_25], %40 {strides = array<i32>} : memref<128x4xf32, #tpu.memory_space<vmem>>, vector<128x4xf32>,
    return
  }
  func.func @transform_0(%arg0: i32) -> (i32, i32) {
    %c0_i32 = arith.constant 0 : i32
    %c0_i32_0 = arith.constant 0 : i32
    return %arg0, %c0_i32 : i32, i32
  }
  func.func @transform_1(%arg0: i32) -> (i32, i32) {
    %c0_i32 = arith.constant 0 : i32
    %c0_i32_0 = arith.constant 0 : i32
    return %arg0, %c0_i32 : i32, i32
  }
  func.func @transform_2(%arg0: i32) -> (i32, i32) {
    %c0_i32 = arith.constant 0 : i32
    %c0_i32_0 = arith.constant 0 : i32
    %c0_i32_1 = arith.constant 0 : i32
    return %c0_i32, %c0_i32_0 : i32, i32
  }
  func.func @transform_3(%arg0: i32) -> (i32, i32) {
    %c0_i32 = arith.constant 0 : i32
    %c0_i32_0 = arith.constant 0 : i32
    %c0_i32_1 = arith.constant 0 : i32
    return %c0_i32, %c0_i32_0 : i32, i32
  }
  func.func @transform_4(%arg0: i32) -> (i32, i32) {
    %c0_i32 = arith.constant 0 : i32
    %c0_i32_0 = arith.constant 0 : i32
    %c0_i32_1 = arith.constant 0 : i32
    return %c0_i32, %c0_i32_0 : i32, i32
  }
  func.func @transform_5(%arg0: i32) -> (i32, i32) {
    %c0_i32 = arith.constant 0 : i32
    %c0_i32_0 = arith.constant 0 : i32
    return %arg0, %c0_i32 : i32, i32
  }
}

</mosaic_0001>

<llo_original>
// kernel: tpu_custom_call.1
$region0: #{tpu_custom_call.1}
  #allocation0 [shape = 'u32[]', space=smem, size = 0x4, offset = 0x4, fixed_abs, tag = 'smem constant byte address 0x4 - core index']
  #allocation1 [shape = 'u32[144,128]{1,0:T(1,128)}', space=vmem, size = 0x12000, scoped, tag = 'internal scratch']
  %s0 = inlined_call_operand.vmem [shape: bf16[256,8], index: 0, kind: input, shape index: {}]
  %s1 = inlined_call_operand.vmem [shape: f32[256,8], index: 1, kind: input, shape index: {}]
  %s2 = inlined_call_operand.vmem [shape: bf16[16,32], index: 2, kind: input, shape index: {}]
  %s3 = inlined_call_operand.vmem [shape: bf16[64,8], index: 3, kind: input, shape index: {}]
  %s4 = inlined_call_operand.vmem [shape: f32[40,32], index: 4, kind: input, shape index: {}]
  %s5 = inlined_call_operand.vmem [shape: f32[256,4], index: 5, kind: output, shape index: {}]
  %s6 = sld [smem:[#allocation0]]
  $region53: #{tpu_custom_call.1} parent=0
    _
  %s8 = ssub.s32 1, %s6
  %s9 = scalar_select 0, %s8, %s6
  loop: start=0, step=1, limit=4
  $region2: #{tpu_custom_call.1} parent=0 // loop_pre_header
    _
  $region3: #{tpu_custom_call.1} parent=0 // loop_header
    %s11 = sphi 0, %s15
    %p12 = scmp.ge.s32.totalorder %s11, 4
    %s21 = sphi 0, %s23
    %s24 = sphi 0, %s21
    %s25 = sphi 0, %s24
    %s41 = sphi 0, %s25
    %s47 = sphi 0, %s49
    %s50 = sphi 0, %s47
    %s51 = sphi 0, %s50
    %s67 = sphi 0, %s51
    %s71 = sphi 0, %s71
    %s73 = sphi 0, %s71
    %s74 = sphi 0, %s73
    %s88 = sphi 0, %s74
    %s92 = sphi 0, %s92
    %s94 = sphi 0, %s92
    %s95 = sphi 0, %s94
    %s109 = sphi 0, %s95
    %s113 = sphi 0, %s113
    %s115 = sphi 0, %s113
    %s116 = sphi 0, %s115
    %s130 = sphi 0, %s116
    %s136 = sphi 0, %s138
    %s139 = sphi 0, %s136
    %s140 = sphi 0, %s139
    %s156 = sphi 0, %s140
  $region4: #{tpu_custom_call.1} parent=0 // loop_header_branch
    %14 = sbr.rel (%p12) target = $region8
  $region5: #{tpu_custom_call.1} parent=0 // loop_body
    %s16 = ssub.s32 %s11, 1
    %s17 = ssub.s32 %s11, 2
    %s18 = sadd.s32 %s11, 1
    %s19 = ssub.s32 %s11, %s18
    %p20 = scmp.eq.s32.totalorder %s19, 0
    %s22 = sadd.s32 %s21, 1
    %s23 = scalar_select %p20, %s21, %s22
    %p26 = pneg %p20
    %p27 = scmp.eq.s32.totalorder %s11, 1
    %p28 = por %p26, %p27
    %p29 = scmp.ne.s32.totalorder %s21, %s24
    %p30 = scmp.eq.s32.totalorder %s11, 0
    %p31 = por %p29, %p30
    %p32 = scmp.ne.s32.totalorder %s21, %s24
    %p33 = scmp.eq.s32.totalorder %s16, 1
    %p34 = por %p32, %p33
    %p35 = scmp.ne.s32.totalorder %s24, %s25
    %p36 = scmp.eq.s32.totalorder %s16, 0
    %p37 = por %p35, %p36
    %p38 = scmp.ne.s32.totalorder %s24, %s25
    %p39 = scmp.eq.s32.totalorder %s17, 1
    %p40 = por %p38, %p39
    %p42 = scmp.ne.s32.totalorder %s25, %s41
    %p43 = scmp.eq.s32.totalorder %s17, 0
    %p44 = por %p42, %p43
    %s45 = ssub.s32 %s11, %s18
    %p46 = scmp.eq.s32.totalorder %s45, 0
    %s48 = sadd.s32 %s47, 1
    %s49 = scalar_select %p46, %s47, %s48
    %p52 = pneg %p46
    %p53 = scmp.eq.s32.totalorder %s11, 1
    %p54 = por %p52, %p53
    %p55 = scmp.ne.s32.totalorder %s47, %s50
    %p56 = scmp.eq.s32.totalorder %s11, 0
    %p57 = por %p55, %p56
    %p58 = scmp.ne.s32.totalorder %s47, %s50
    %p59 = scmp.eq.s32.totalorder %s16, 1
    %p60 = por %p58, %p59
    %p61 = scmp.ne.s32.totalorder %s50, %s51
    %p62 = scmp.eq.s32.totalorder %s16, 0
    %p63 = por %p61, %p62
    %p64 = scmp.ne.s32.totalorder %s50, %s51
    %p65 = scmp.eq.s32.totalorder %s17, 1
    %p66 = por %p64, %p65
    %p68 = scmp.ne.s32.totalorder %s51, %s67
    %p69 = scmp.eq.s32.totalorder %s17, 0
    %p70 = por %p68, %p69
    %s72 = sadd.s32 %s71, 1
    %p75 = scmp.eq.s32.totalorder %s11, 1
    %p76 = scmp.ne.s32.totalorder %s71, %s73
    %p77 = scmp.eq.s32.totalorder %s11, 0
    %p78 = por %p76, %p77
    %p79 = scmp.ne.s32.totalorder %s71, %s73
    %p80 = scmp.eq.s32.totalorder %s16, 1
    %p81 = por %p79, %p80
    %p82 = scmp.ne.s32.totalorder %s73, %s74
    %p83 = scmp.eq.s32.totalorder %s16, 0
    %p84 = por %p82, %p83
    %p85 = scmp.ne.s32.totalorder %s73, %s74
    %p86 = scmp.eq.s32.totalorder %s17, 1
    %p87 = por %p85, %p86
    %p89 = scmp.ne.s32.totalorder %s74, %s88
    %p90 = scmp.eq.s32.totalorder %s17, 0
    %p91 = por %p89, %p90
    %s93 = sadd.s32 %s92, 1
    %p96 = scmp.eq.s32.totalorder %s11, 1
    %p97 = scmp.ne.s32.totalorder %s92, %s94
    %p98 = scmp.eq.s32.totalorder %s11, 0
    %p99 = por %p97, %p98
    %p100 = scmp.ne.s32.totalorder %s92, %s94
    %p101 = scmp.eq.s32.totalorder %s16, 1
    %p102 = por %p100, %p101
    %p103 = scmp.ne.s32.totalorder %s94, %s95
    %p104 = scmp.eq.s32.totalorder %s16, 0
    %p105 = por %p103, %p104
    %p106 = scmp.ne.s32.totalorder %s94, %s95
    %p107 = scmp.eq.s32.totalorder %s17, 1
    %p108 = por %p106, %p107
    %p110 = scmp.ne.s32.totalorder %s95, %s109
    %p111 = scmp.eq.s32.totalorder %s17, 0
    %p112 = por %p110, %p111
    %s114 = sadd.s32 %s113, 1
    %p117 = scmp.eq.s32.totalorder %s11, 1
    %p118 = scmp.ne.s32.totalorder %s113, %s115
    %p119 = scmp.eq.s32.totalorder %s11, 0
    %p120 = por %p118, %p119
    %p121 = scmp.ne.s32.totalorder %s113, %s115
    %p122 = scmp.eq.s32.totalorder %s16, 1
    %p123 = por %p121, %p122
    %p124 = scmp.ne.s32.totalorder %s115, %s116
    %p125 = scmp.eq.s32.totalorder %s16, 0
    %p126 = por %p124, %p125
    %p127 = scmp.ne.s32.totalorder %s115, %s116
    %p128 = scmp.eq.s32.totalorder %s17, 1
    %p129 = por %p127, %p128
    %p131 = scmp.ne.s32.totalorder %s116, %s130
    %p132 = scmp.eq.s32.totalorder %s17, 0
    %p133 = por %p131, %p132
    %s134 = ssub.s32 %s11, %s18
    %p135 = scmp.eq.s32.totalorder %s134, 0
    %s137 = sadd.s32 %s136, 1
    %s138 = scalar_select %p135, %s136, %s137
    %p141 = pneg %p135
    %p142 = scmp.eq.s32.totalorder %s11, 1
    %p143 = por %p141, %p142
    %p144 = scmp.ne.s32.totalorder %s136, %s139
    %p145 = scmp.eq.s32.totalorder %s11, 0
    %p146 = por %p144, %p145
    %p147 = scmp.ne.s32.totalorder %s136, %s139
    %p148 = scmp.eq.s32.totalorder %s16, 1
    %p149 = por %p147, %p148
    %p150 = scmp.ne.s32.totalorder %s139, %s140
    %p151 = scmp.eq.s32.totalorder %s16, 0
    %p152 = por %p150, %p151
    %p153 = scmp.ne.s32.totalorder %s139, %s140
    %p154 = scmp.eq.s32.totalorder %s17, 1
    %p155 = por %p153, %p154
    %p157 = scmp.ne.s32.totalorder %s140, %s156
    %p158 = scmp.eq.s32.totalorder %s17, 0
    %p159 = por %p157, %p158
    %p160 = scmp.le.s32.totalorder 1, %s11
    %p161 = scmp.lt.s32.totalorder %s11, 3
    %p162 = pnand %p160, %p161
    %p163 = pneg %p162
    // Predicated region
    $region9: #{tpu_custom_call.1} parent=5 // pred_check
      _
    $region10: #{tpu_custom_call.1} parent=5 // pred_check_branch
      %165 = sbr.rel (%p162) target = $region12
    $region11: #{tpu_custom_call.1} parent=5 // pred_region
      %s166 = ssub.s32 %s11, 1
      // Predicated region
      $region13: #{tpu_custom_call.1} parent=11 // pred_check
        %p167 = pneg %p84
      $region14: #{tpu_custom_call.1} parent=11 // pred_check_branch
        %169 = sbr.rel (%p167) target = $region16
      $region15: #{tpu_custom_call.1} parent=11 // pred_region
        _
      $region16: #{tpu_custom_call.1} parent=11 // pred_fallthru
        _
      // Predicated region
      $region17: #{tpu_custom_call.1} parent=11 // pred_check
        %p170 = pneg %p105
      $region18: #{tpu_custom_call.1} parent=11 // pred_check_branch
        %172 = sbr.rel (%p170) target = $region20
      $region19: #{tpu_custom_call.1} parent=11 // pred_region
        _
      $region20: #{tpu_custom_call.1} parent=11 // pred_fallthru
        _
      // Predicated region
      $region21: #{tpu_custom_call.1} parent=11 // pred_check
        %p173 = pneg %p126
      $region22: #{tpu_custom_call.1} parent=11 // pred_check_branch
        %175 = sbr.rel (%p173) target = $region24
      $region23: #{tpu_custom_call.1} parent=11 // pred_region
        _
      $region24: #{tpu_custom_call.1} parent=11 // pred_fallthru
        _
    $region12: #{tpu_custom_call.1} parent=5 // pred_fallthru
      _
    %p176 = scmp.lt.s32.totalorder %s11, 2
    // Predicated region
    $region25: #{tpu_custom_call.1} parent=5 // pred_check
      %p177 = pneg %p176
    $region26: #{tpu_custom_call.1} parent=5 // pred_check_branch
      %179 = sbr.rel (%p177) target = $region28
    $region27: #{tpu_custom_call.1} parent=5 // pred_region
      // Predicated region
      $region29: #{tpu_custom_call.1} parent=27 // pred_check
        %p180 = pneg %p31
      $region30: #{tpu_custom_call.1} parent=27 // pred_check_branch
        %182 = sbr.rel (%p180) target = $region32
      $region31: #{tpu_custom_call.1} parent=27 // pred_region
        %s183 = smul.u32 16, %s11
        %p184 = scmp.lt.s32.totalorder %s183, 31
        %s185 = scalar_select %p184, %s183, 31
        %s186 = smul.addr %s185, 4
        %s187 = scalar_lea.vmem %s0, %s186
        %s188 = smul.u32 16, %s11
      $region32: #{tpu_custom_call.1} parent=27 // pred_fallthru
        _
      // Predicated region
      $region33: #{tpu_custom_call.1} parent=27 // pred_check
        %p189 = pneg %p57
      $region34: #{tpu_custom_call.1} parent=27 // pred_check_branch
        %191 = sbr.rel (%p189) target = $region36
      $region35: #{tpu_custom_call.1} parent=27 // pred_region
        %s192 = smul.u32 16, %s11
        %p193 = scmp.lt.s32.totalorder %s192, 31
        %s194 = scalar_select %p193, %s192, 31
        %s195 = smul.addr %s194, 8
        %s196 = scalar_lea.vmem %s1, %s195
        %s197 = smul.u32 16, %s11
      $region36: #{tpu_custom_call.1} parent=27 // pred_fallthru
        _
    $region28: #{tpu_custom_call.1} parent=5 // pred_fallthru
      _
    %p198 = scmp.le.s32.totalorder 1, %s11
    %p199 = scmp.lt.s32.totalorder %s11, 3
    %p200 = pnand %p198, %p199
    %p201 = pneg %p200
    // Predicated region
    $region37: #{tpu_custom_call.1} parent=5 // pred_check
      _
    $region38: #{tpu_custom_call.1} parent=5 // pred_check_branch
      %203 = sbr.rel (%p200) target = $region40
    $region39: #{tpu_custom_call.1} parent=5 // pred_region
      %s204 = ssub.s32 %s11, 1
      %s205 = smul.u32 16, %s16
      %p206 = scmp.lt.s32.totalorder %s205, 31
      %s207 = scalar_select %p206, %s205, 31
      %s208 = smul.addr %s207, 4
      %s209 = scalar_lea.vmem %s0, %s208
      %p210 = pneg %p37
      %p211 = pneg %p34
      %s212 = smul.u32 16, %s16
      %p213 = scmp.lt.s32.totalorder %s212, 31
      %s214 = scalar_select %p213, %s212, 31
      %s215 = smul.addr %s214, 8
      %s216 = scalar_lea.vmem %s1, %s215
      %p217 = pneg %p63
      %p218 = pneg %p60
      %p219 = pneg %p84
      %p220 = pneg %p81
      %p221 = pneg %p105
      %p222 = pneg %p102
      %p223 = pneg %p126
      %p224 = pneg %p123
      %p225 = pneg %p152
      %p226 = pneg %p149
      %s227 = smul.u32 16, %s16
      %p228 = scmp.lt.s32.totalorder %s227, 31
      %s229 = scalar_select %p228, %s227, 31
      %s230 = smul.addr %s229, 8
      %s231 = scalar_lea.vmem %s5, %s230
      %s232 = smul.u32 16, %s16
      %p233 = scmp.lt.s32.totalorder %s232, 31
      %s234 = scalar_select %p233, %s232, 31
      %s235 = smul.addr %s234, 4
      %s236 = scalar_lea.vmem %s0, %s235
      %s237 = smul.u32 16, %s16
      %s238 = smul.u32 16, %s16
      %p239 = scmp.lt.s32.totalorder %s238, 31
      %s240 = scalar_select %p239, %s238, 31
      %s241 = smul.addr %s240, 8
      %s242 = scalar_lea.vmem %s1, %s241
      %s243 = smul.u32 16, %s16
      %s244 = smul.u32 16, %s16
      %p245 = scmp.lt.s32.totalorder %s244, 31
      %s246 = scalar_select %p245, %s244, 31
      %s247 = smul.addr %s246, 8
      %s248 = scalar_lea.vmem %s5, %s247
      %s249 = smul.u32 16, %s16
      %v251 = vld [vmem:[%s2] sm:$0xf]
      %v252 = vld [vmem:[%s2 + $0x4] sm:$0xf]
      %v253 = vld [vmem:[%s3] sm:$0xf]
      %v254 = vld [vmem:[%s3 + $0x4] sm:$0xf]
      %v255 = vld [vmem:[%s3 + $0x8] sm:$0xf]
      %v256 = vld [vmem:[%s3 + $0xc] sm:$0xf]
      %v257 = vld [vmem:[%s3 + $0x10] sm:$0xf]
      %v258 = vld [vmem:[%s3 + $0x14] sm:$0xf]
      %v259 = vld [vmem:[%s3 + $0x18] sm:$0xf]
      %v260 = vld [vmem:[%s3 + $0x1c] sm:$0xf]
      %v261 = vld [vmem:[%s4] sm:$0x1]
      %v262 = vld [vmem:[%s4 + $0x8] sm:$0x1]
      %v263 = vld [vmem:[%s4 + $0x10] sm:$0x1]
      %v264 = vld [vmem:[%s4 + $0x18] sm:$0x1]
      %v265 = vld [vmem:[%s4 + $0x20] sm:$0x1]
      %v266 = vmul.f32 %v265, 10000.0
      %v267 = vld [vmem:[%s236] sm:$0xf]
      %v268 = vld [vmem:[%s236 + $0x4] sm:$0xf]
      %v269 = vld [vmem:[%s236 + $0x8] sm:$0xf]
      %v270 = vld [vmem:[%s236 + $0xc] sm:$0xf]
      %v271 = vld [vmem:[%s236 + $0x10] sm:$0xf]
      %v272 = vld [vmem:[%s236 + $0x14] sm:$0xf]
      %v273 = vld [vmem:[%s236 + $0x18] sm:$0xf]
      %v274 = vld [vmem:[%s236 + $0x1c] sm:$0xf]
      %v275 = vld [vmem:[%s236 + $0x20] sm:$0xf]
      %v276 = vld [vmem:[%s236 + $0x24] sm:$0xf]
      %v277 = vld [vmem:[%s236 + $0x28] sm:$0xf]
      %v278 = vld [vmem:[%s236 + $0x2c] sm:$0xf]
      %v279 = vld [vmem:[%s236 + $0x30] sm:$0xf]
      %v280 = vld [vmem:[%s236 + $0x34] sm:$0xf]
      %v281 = vld [vmem:[%s236 + $0x38] sm:$0xf]
      %v282 = vld [vmem:[%s236 + $0x3c] sm:$0xf]
      %v283 = vlaneseq
      %v284 = vshrl.u32 %v283, 7
      %v285 = vsub.s32 0, %v284
      %v286 = vrot.slane %v261, %v285
      %v303 = vunpack.c.l.b16 %v267
      %v304 = vunpack.c.l.b16 %v268
      %v305 = vunpack.c.l.b16 %v269
      %v306 = vunpack.c.l.b16 %v270
      %v307 = vunpack.c.l.b16 %v271
      %v308 = vunpack.c.l.b16 %v272
      %v309 = vunpack.c.l.b16 %v273
      %v310 = vunpack.c.l.b16 %v274
      %v311 = vunpack.c.l.b16 %v275
      %v312 = vunpack.c.l.b16 %v276
      %v313 = vunpack.c.l.b16 %v277
      %v314 = vunpack.c.l.b16 %v278
      %v315 = vunpack.c.l.b16 %v279
      %v316 = vunpack.c.l.b16 %v280
      %v317 = vunpack.c.l.b16 %v281
      %v318 = vunpack.c.l.b16 %v282
      %v319 = vpack.c.b16 %v304, %v303
      %v320 = vpack.c.b16 %v306, %v305
      %v321 = vpack.c.b16 %v308, %v307
      %v322 = vpack.c.b16 %v310, %v309
      %v323 = vpack.c.b16 %v312, %v311
      %v324 = vpack.c.b16 %v314, %v313
      %v325 = vpack.c.b16 %v316, %v315
      %v326 = vpack.c.b16 %v318, %v317
      %vm327 = vcmask 64512
      %v329 = vsel %vm327, %v319, 0
      %v332 = vsel %vm327, %v320, 0
      %v335 = vsel %vm327, %v321, 0
      %v338 = vsel %vm327, %v322, 0
      %v341 = vsel %vm327, %v323, 0
      %v344 = vsel %vm327, %v324, 0
      %v347 = vsel %vm327, %v325, 0
      %v350 = vsel %vm327, %v326, 0
      %vm352 = vcmask 1043456
      %v354 = vsel %vm352, %v251, 0
      %356 = vmatprep.subr.bf16.mxu0 0
      %357 = vmatpush1.bf16.msra.mxu0 0
      %358 = vmatprep.subr.bf16.mxu0 0
      %359 = vmatpush1.bf16.msra.mxu0 0
      %360 = vmatprep.subr.bf16.mxu0 0
      %361 = vmatpush1.bf16.msra.mxu0 0
      %362 = vmatprep.subr.bf16.mxu0 0
      %363 = vmatpush1.bf16.msra.mxu0 0
      %364 = vmatprep.subr.bf16.mxu0 0
      %365 = vmatpush1.bf16.msra.mxu0 0
      %366 = vmatprep.subr.bf16.mxu0 0
      %367 = vmatpush1.bf16.msra.mxu0 0
      %368 = vmatprep.subr.bf16.mxu0 0
      %369 = vmatpush1.bf16.msra.mxu0 0
      %370 = vmatprep.subr.bf16.mxu0 0
      %371 = vmatpush1.bf16.msra.mxu0 %v354
      %372 = vmatprep.subr.bf16.mxu0 0
      %373 = vmatpush2.bf16.msra.mxu0 0
      %374 = vmatprep.subr.bf16.mxu0 0
      %375 = vmatpush2.bf16.msra.mxu0 0
      %376 = vmatprep.subr.bf16.mxu0 0
      %377 = vmatpush2.bf16.msra.mxu0 0
      %378 = vmatprep.subr.bf16.mxu0 0
      %379 = vmatpush2.bf16.msra.mxu0 0
      %380 = vmatprep.subr.bf16.mxu0 0
      %381 = vmatpush2.bf16.msra.mxu0 0
      %382 = vmatprep.subr.bf16.mxu0 0
      %383 = vmatpush2.bf16.msra.mxu0 0
      %384 = vmatprep.subr.bf16.mxu0 0
      %385 = vmatpush2.bf16.msra.mxu0 0
      %386 = vmatprep.subr.bf16.mxu0 0
      %387 = vmatpush2.bf16.msra.mxu0 0
      %388 = vmatprep.mubr.bf16.mxu0 0
      %389 = vmatmul.mubr.bf16.gmra.mxu0 %v329
      %v390 = vpop.f32.mrf.mxu0
      %v391 = vadd.f32 %v286, %v390
      %v392 = vpop.f32.mrf.mxu0
      %v393 = vpop.f32.mrf.mxu0
      %v394 = vadd.f32 %v286, %v393
      %v395 = vpop.f32.mrf.mxu0
      %396 = vmatprep.mubr.bf16.mxu0 0
      %397 = vmatmul.mubr.bf16.gmra.mxu0 %v332
      %v398 = vpop.f32.mrf.mxu0
      %v399 = vadd.f32 %v286, %v398
      %v400 = vpop.f32.mrf.mxu0
      %v401 = vpop.f32.mrf.mxu0
      %v402 = vadd.f32 %v286, %v401
      %v403 = vpop.f32.mrf.mxu0
      %404 = vmatprep.mubr.bf16.mxu0 0
      %405 = vmatmul.mubr.bf16.gmra.mxu0 %v335
      %v406 = vpop.f32.mrf.mxu0
      %v407 = vadd.f32 %v286, %v406
      %v408 = vpop.f32.mrf.mxu0
      %v409 = vpop.f32.mrf.mxu0
      %v410 = vadd.f32 %v286, %v409
      %v411 = vpop.f32.mrf.mxu0
      %412 = vmatprep.mubr.bf16.mxu0 0
      %413 = vmatmul.mubr.bf16.gmra.mxu0 %v338
      %v414 = vpop.f32.mrf.mxu0
      %v415 = vadd.f32 %v286, %v414
      %v416 = vpop.f32.mrf.mxu0
      %v417 = vpop.f32.mrf.mxu0
      %v418 = vadd.f32 %v286, %v417
      %v419 = vpop.f32.mrf.mxu0
      %420 = vmatprep.mubr.bf16.mxu0 0
      %421 = vmatmul.mubr.bf16.gmra.mxu0 %v341
      %v422 = vpop.f32.mrf.mxu0
      %v423 = vadd.f32 %v286, %v422
      %v424 = vpop.f32.mrf.mxu0
      %v425 = vpop.f32.mrf.mxu0
      %v426 = vadd.f32 %v286, %v425
      %v427 = vpop.f32.mrf.mxu0
      %428 = vmatprep.mubr.bf16.mxu0 0
      %429 = vmatmul.mubr.bf16.gmra.mxu0 %v344
      %v430 = vpop.f32.mrf.mxu0
      %v431 = vadd.f32 %v286, %v430
      %v432 = vpop.f32.mrf.mxu0
      %v433 = vpop.f32.mrf.mxu0
      %v434 = vadd.f32 %v286, %v433
      %v435 = vpop.f32.mrf.mxu0
      %436 = vmatprep.mubr.bf16.mxu0 0
      %437 = vmatmul.mubr.bf16.gmra.mxu0 %v347
      %v438 = vpop.f32.mrf.mxu0
      %v439 = vadd.f32 %v286, %v438
      %v440 = vpop.f32.mrf.mxu0
      %v441 = vpop.f32.mrf.mxu0
      %v442 = vadd.f32 %v286, %v441
      %v443 = vpop.f32.mrf.mxu0
      %444 = vmatprep.mubr.bf16.mxu0 0
      %445 = vmatmul.mubr.bf16.gmra.mxu0 %v350
      %v446 = vpop.f32.mrf.mxu0
      %v447 = vadd.f32 %v286, %v446
      %v448 = vpop.f32.mrf.mxu0
      %v449 = vpop.f32.mrf.mxu0
      %v450 = vadd.f32 %v286, %v449
      %v451 = vpop.f32.mrf.mxu0
      %452 = vdwg.mxu0
      %v453 = vmax.f32 %v391, 0.0
      %v454 = vmax.f32 %v394, 0.0
      %v455 = vmax.f32 %v399, 0.0
      %v456 = vmax.f32 %v402, 0.0
      %v457 = vmax.f32 %v407, 0.0
      %v458 = vmax.f32 %v410, 0.0
      %v459 = vmax.f32 %v415, 0.0
      %v460 = vmax.f32 %v418, 0.0
      %v461 = vmax.f32 %v423, 0.0
      %v462 = vmax.f32 %v426, 0.0
      %v463 = vmax.f32 %v431, 0.0
      %v464 = vmax.f32 %v434, 0.0
      %v465 = vmax.f32 %v439, 0.0
      %v466 = vmax.f32 %v442, 0.0
      %v467 = vmax.f32 %v447, 0.0
      %v468 = vmax.f32 %v450, 0.0
      %v469 = vpack.c.bf16 %v454, %v453
      %v470 = vpack.c.bf16 %v456, %v455
      %v471 = vpack.c.bf16 %v458, %v457
      %v472 = vpack.c.bf16 %v460, %v459
      %v473 = vpack.c.bf16 %v462, %v461
      %v474 = vpack.c.bf16 %v464, %v463
      %v475 = vpack.c.bf16 %v466, %v465
      %v476 = vpack.c.bf16 %v468, %v467
      %v477 = vlaneseq
      %v478 = vshrl.u32 %v477, 7
      %v479 = vsub.s32 0, %v478
      %v480 = vrot.slane %v262, %v479
      %v485 = vunpack.c.l.b16 %v253
      %v486 = vunpack.c.l.b16 %v254
      %v487 = vunpack.c.l.b16 %v255
      %v488 = vunpack.c.l.b16 %v256
      %v489 = vpack.c.b16 %v486, %v485
      %v490 = vpack.c.b16 %v488, %v487
      %vm493 = vcmask 261120
      %v495 = vsel %vm493, %v469, 0
      %v498 = vsel %vm493, %v470, 0
      %v501 = vsel %vm493, %v471, 0
      %v504 = vsel %vm493, %v472, 0
      %v507 = vsel %vm493, %v473, 0
      %v510 = vsel %vm493, %v474, 0
      %v513 = vsel %vm493, %v475, 0
      %v516 = vsel %vm493, %v476, 0
      %518 = vmatprep.subr.bf16.mxu0 0
      %519 = vmatpush1.bf16.msra.mxu0 0
      %520 = vmatprep.subr.bf16.mxu0 0
      %521 = vmatpush1.bf16.msra.mxu0 0
      %522 = vmatprep.subr.bf16.mxu0 0
      %523 = vmatpush1.bf16.msra.mxu0 0
      %524 = vmatprep.subr.bf16.mxu0 0
      %525 = vmatpush1.bf16.msra.mxu0 0
      %526 = vmatprep.subr.bf16.mxu0 0
      %527 = vmatpush1.bf16.msra.mxu0 0
      %528 = vmatprep.subr.bf16.mxu0 0
      %529 = vmatpush1.bf16.msra.mxu0 0
      %530 = vmatprep.subr.bf16.mxu0 0
      %531 = vmatpush1.bf16.msra.mxu0 %v490
      %532 = vmatprep.subr.bf16.mxu0 0
      %533 = vmatpush1.bf16.msra.mxu0 %v489
      %534 = vmatprep.subr.bf16.mxu0 0
      %535 = vmatpush2.bf16.msra.mxu0 0
      %536 = vmatprep.subr.bf16.mxu0 0
      %537 = vmatpush2.bf16.msra.mxu0 0
      %538 = vmatprep.subr.bf16.mxu0 0
      %539 = vmatpush2.bf16.msra.mxu0 0
      %540 = vmatprep.subr.bf16.mxu0 0
      %541 = vmatpush2.bf16.msra.mxu0 0
      %542 = vmatprep.subr.bf16.mxu0 0
      %543 = vmatpush2.bf16.msra.mxu0 0
      %544 = vmatprep.subr.bf16.mxu0 0
      %545 = vmatpush2.bf16.msra.mxu0 0
      %546 = vmatprep.subr.bf16.mxu0 0
      %547 = vmatpush2.bf16.msra.mxu0 0
      %548 = vmatprep.subr.bf16.mxu0 0
      %549 = vmatpush2.bf16.msra.mxu0 0
      %550 = vmatprep.mubr.bf16.mxu0 0
      %551 = vmatmul.mubr.bf16.gmra.mxu0 %v495
      %v552 = vpop.f32.mrf.mxu0
      %v553 = vadd.f32 %v480, %v552
      %v554 = vpop.f32.mrf.mxu0
      %v555 = vpop.f32.mrf.mxu0
      %v556 = vadd.f32 %v480, %v555
      %v557 = vpop.f32.mrf.mxu0
      %558 = vmatprep.mubr.bf16.mxu0 0
      %559 = vmatmul.mubr.bf16.gmra.mxu0 %v498
      %v560 = vpop.f32.mrf.mxu0
      %v561 = vadd.f32 %v480, %v560
      %v562 = vpop.f32.mrf.mxu0
      %v563 = vpop.f32.mrf.mxu0
      %v564 = vadd.f32 %v480, %v563
      %v565 = vpop.f32.mrf.mxu0
      %566 = vmatprep.mubr.bf16.mxu0 0
      %567 = vmatmul.mubr.bf16.gmra.mxu0 %v501
      %v568 = vpop.f32.mrf.mxu0
      %v569 = vadd.f32 %v480, %v568
      %v570 = vpop.f32.mrf.mxu0
      %v571 = vpop.f32.mrf.mxu0
      %v572 = vadd.f32 %v480, %v571
      %v573 = vpop.f32.mrf.mxu0
      %574 = vmatprep.mubr.bf16.mxu0 0
      %575 = vmatmul.mubr.bf16.gmra.mxu0 %v504
      %v576 = vpop.f32.mrf.mxu0
      %v577 = vadd.f32 %v480, %v576
      %v578 = vpop.f32.mrf.mxu0
      %v579 = vpop.f32.mrf.mxu0
      %v580 = vadd.f32 %v480, %v579
      %v581 = vpop.f32.mrf.mxu0
      %582 = vmatprep.mubr.bf16.mxu0 0
      %583 = vmatmul.mubr.bf16.gmra.mxu0 %v507
      %v584 = vpop.f32.mrf.mxu0
      %v585 = vadd.f32 %v480, %v584
      %v586 = vpop.f32.mrf.mxu0
      %v587 = vpop.f32.mrf.mxu0
      %v588 = vadd.f32 %v480, %v587
      %v589 = vpop.f32.mrf.mxu0
      %590 = vmatprep.mubr.bf16.mxu0 0
      %591 = vmatmul.mubr.bf16.gmra.mxu0 %v510
      %v592 = vpop.f32.mrf.mxu0
      %v593 = vadd.f32 %v480, %v592
      %v594 = vpop.f32.mrf.mxu0
      %v595 = vpop.f32.mrf.mxu0
      %v596 = vadd.f32 %v480, %v595
      %v597 = vpop.f32.mrf.mxu0
      %598 = vmatprep.mubr.bf16.mxu0 0
      %599 = vmatmul.mubr.bf16.gmra.mxu0 %v513
      %v600 = vpop.f32.mrf.mxu0
      %v601 = vadd.f32 %v480, %v600
      %v602 = vpop.f32.mrf.mxu0
      %v603 = vpop.f32.mrf.mxu0
      %v604 = vadd.f32 %v480, %v603
      %v605 = vpop.f32.mrf.mxu0
      %606 = vmatprep.mubr.bf16.mxu0 0
      %607 = vmatmul.mubr.bf16.gmra.mxu0 %v516
      %v608 = vpop.f32.mrf.mxu0
      %v609 = vadd.f32 %v480, %v608
      %v610 = vpop.f32.mrf.mxu0
      %v611 = vpop.f32.mrf.mxu0
      %v612 = vadd.f32 %v480, %v611
      %v613 = vpop.f32.mrf.mxu0
      %614 = vdwg.mxu0
      %v615 = vld [vmem:[%s242] sm:$0xff]
      %v616 = vld [vmem:[%s242 + $0x8] sm:$0xff]
      %v617 = vld [vmem:[%s242 + $0x10] sm:$0xff]
      %v618 = vld [vmem:[%s242 + $0x18] sm:$0xff]
      %v619 = vld [vmem:[%s242 + $0x20] sm:$0xff]
      %v620 = vld [vmem:[%s242 + $0x28] sm:$0xff]
      %v621 = vld [vmem:[%s242 + $0x30] sm:$0xff]
      %v622 = vld [vmem:[%s242 + $0x38] sm:$0xff]
      %v623 = vld [vmem:[%s242 + $0x40] sm:$0xff]
      %v624 = vld [vmem:[%s242 + $0x48] sm:$0xff]
      %v625 = vld [vmem:[%s242 + $0x50] sm:$0xff]
      %v626 = vld [vmem:[%s242 + $0x58] sm:$0xff]
      %v627 = vld [vmem:[%s242 + $0x60] sm:$0xff]
      %v628 = vld [vmem:[%s242 + $0x68] sm:$0xff]
      %v629 = vld [vmem:[%s242 + $0x70] sm:$0xff]
      %v630 = vld [vmem:[%s242 + $0x78] sm:$0xff]
      %v631 = vmul.f32 %v553, 0.5
      %v632 = vmul.f32 %v556, 0.5
      %v633 = vmul.f32 %v561, 0.5
      %v634 = vmul.f32 %v564, 0.5
      %v635 = vmul.f32 %v569, 0.5
      %v636 = vmul.f32 %v572, 0.5
      %v637 = vmul.f32 %v577, 0.5
      %v638 = vmul.f32 %v580, 0.5
      %v639 = vmul.f32 %v585, 0.5
      %v640 = vmul.f32 %v588, 0.5
      %v641 = vmul.f32 %v593, 0.5
      %v642 = vmul.f32 %v596, 0.5
      %v643 = vmul.f32 %v601, 0.5
      %v644 = vmul.f32 %v604, 0.5
      %v645 = vmul.f32 %v609, 0.5
      %v646 = vmul.f32 %v612, 0.5
      %v647 = vlaneseq
      %v648 = vshrl.u32 %v647, 7
      %v649 = vsub.s32 0, %v648
      %v650 = vrot.slane %v266, %v649
      %v651 = vsub.f32 %v631, %v650
      %v652 = vsub.f32 %v632, %v650
      %v653 = vsub.f32 %v633, %v650
      %v654 = vsub.f32 %v634, %v650
      %v655 = vsub.f32 %v635, %v650
      %v656 = vsub.f32 %v636, %v650
      %v657 = vsub.f32 %v637, %v650
      %v658 = vsub.f32 %v638, %v650
      %v659 = vsub.f32 %v639, %v650
      %v660 = vsub.f32 %v640, %v650
      %v661 = vsub.f32 %v641, %v650
      %v662 = vsub.f32 %v642, %v650
      %v663 = vsub.f32 %v643, %v650
      %v664 = vsub.f32 %v644, %v650
      %v665 = vsub.f32 %v645, %v650
      %v666 = vsub.f32 %v646, %v650
      %v667 = vmul.f32 %v651, 1.442695
      %v668 = vpow.pop %v667
      %v669 = vmul.f32 %v652, 1.442695
      %v670 = vpow.pop %v669
      %v671 = vmul.f32 %v653, 1.442695
      %v672 = vpow.pop %v671
      %v673 = vmul.f32 %v654, 1.442695
      %v674 = vpow.pop %v673
      %v675 = vmul.f32 %v655, 1.442695
      %v676 = vpow.pop %v675
      %v677 = vmul.f32 %v656, 1.442695
      %v678 = vpow.pop %v677
      %v679 = vmul.f32 %v657, 1.442695
      %v680 = vpow.pop %v679
      %v681 = vmul.f32 %v658, 1.442695
      %v682 = vpow.pop %v681
      %v683 = vmul.f32 %v659, 1.442695
      %v684 = vpow.pop %v683
      %v685 = vmul.f32 %v660, 1.442695
      %v686 = vpow.pop %v685
      %v687 = vmul.f32 %v661, 1.442695
      %v688 = vpow.pop %v687
      %v689 = vmul.f32 %v662, 1.442695
      %v690 = vpow.pop %v689
      %v691 = vmul.f32 %v663, 1.442695
      %v692 = vpow.pop %v691
      %v693 = vmul.f32 %v664, 1.442695
      %v694 = vpow.pop %v693
      %v695 = vmul.f32 %v665, 1.442695
      %v696 = vpow.pop %v695
      %v697 = vmul.f32 %v666, 1.442695
      %v698 = vpow.pop %v697
      %v699 = vlaneseq
      %v700 = vshrl.u32 %v699, 7
      %v701 = vsub.s32 0, %v700
      %v702 = vrot.slane %v265, %v701
      %v703 = vmul.f32 %v553, %v702
      %v704 = vmul.f32 %v556, %v702
      %v705 = vmul.f32 %v561, %v702
      %v706 = vmul.f32 %v564, %v702
      %v707 = vmul.f32 %v569, %v702
      %v708 = vmul.f32 %v572, %v702
      %v709 = vmul.f32 %v577, %v702
      %v710 = vmul.f32 %v580, %v702
      %v711 = vmul.f32 %v585, %v702
      %v712 = vmul.f32 %v588, %v702
      %v713 = vmul.f32 %v593, %v702
      %v714 = vmul.f32 %v596, %v702
      %v715 = vmul.f32 %v601, %v702
      %v716 = vmul.f32 %v604, %v702
      %v717 = vmul.f32 %v609, %v702
      %v718 = vmul.f32 %v612, %v702
      %v719 = vmul.f32 %v615, %v668
      %v720 = vmul.f32 %v616, %v670
      %v721 = vmul.f32 %v617, %v672
      %v722 = vmul.f32 %v618, %v674
      %v723 = vmul.f32 %v619, %v676
      %v724 = vmul.f32 %v620, %v678
      %v725 = vmul.f32 %v621, %v680
      %v726 = vmul.f32 %v622, %v682
      %v727 = vmul.f32 %v623, %v684
      %v728 = vmul.f32 %v624, %v686
      %v729 = vmul.f32 %v625, %v688
      %v730 = vmul.f32 %v626, %v690
      %v731 = vmul.f32 %v627, %v692
      %v732 = vmul.f32 %v628, %v694
      %v733 = vmul.f32 %v629, %v696
      %v734 = vmul.f32 %v630, %v698
      %v735 = vadd.f32 %v703, %v719
      %v736 = vadd.f32 %v704, %v720
      %v737 = vadd.f32 %v705, %v721
      %v738 = vadd.f32 %v706, %v722
      %v739 = vadd.f32 %v707, %v723
      %v740 = vadd.f32 %v708, %v724
      %v741 = vadd.f32 %v709, %v725
      %v742 = vadd.f32 %v710, %v726
      %v743 = vadd.f32 %v711, %v727
      %v744 = vadd.f32 %v712, %v728
      %v745 = vadd.f32 %v713, %v729
      %v746 = vadd.f32 %v714, %v730
      %v747 = vadd.f32 %v715, %v731
      %v748 = vadd.f32 %v716, %v732
      %v749 = vadd.f32 %v717, %v733
      %v750 = vadd.f32 %v718, %v734
      %v751 = vpack.c.bf16 %v736, %v735
      %v752 = vpack.c.bf16 %v738, %v737
      %v753 = vpack.c.bf16 %v740, %v739
      %v754 = vpack.c.bf16 %v742, %v741
      %v755 = vpack.c.bf16 %v744, %v743
      %v756 = vpack.c.bf16 %v746, %v745
      %v757 = vpack.c.bf16 %v748, %v747
      %v758 = vpack.c.bf16 %v750, %v749
      %v759 = vlaneseq
      %v760 = vshrl.u32 %v759, 7
      %v761 = vsub.s32 0, %v760
      %v762 = vrot.slane %v263, %v761
      %v764 = vsel %vm327, %v751, 0
      %v767 = vsel %vm327, %v752, 0
      %v770 = vsel %vm327, %v753, 0
      %v773 = vsel %vm327, %v754, 0
      %v776 = vsel %vm327, %v755, 0
      %v779 = vsel %vm327, %v756, 0
      %v782 = vsel %vm327, %v757, 0
      %v785 = vsel %vm327, %v758, 0
      %v788 = vsel %vm352, %v252, 0
      %790 = vmatprep.subr.bf16.mxu0 0
      %791 = vmatpush1.bf16.msra.mxu0 0
      %792 = vmatprep.subr.bf16.mxu0 0
      %793 = vmatpush1.bf16.msra.mxu0 0
      %794 = vmatprep.subr.bf16.mxu0 0
      %795 = vmatpush1.bf16.msra.mxu0 0
      %796 = vmatprep.subr.bf16.mxu0 0
      %797 = vmatpush1.bf16.msra.mxu0 0
      %798 = vmatprep.subr.bf16.mxu0 0
      %799 = vmatpush1.bf16.msra.mxu0 0
      %800 = vmatprep.subr.bf16.mxu0 0
      %801 = vmatpush1.bf16.msra.mxu0 0
      %802 = vmatprep.subr.bf16.mxu0 0
      %803 = vmatpush1.bf16.msra.mxu0 0
      %804 = vmatprep.subr.bf16.mxu0 0
      %805 = vmatpush1.bf16.msra.mxu0 %v788
      %806 = vmatprep.subr.bf16.mxu0 0
      %807 = vmatpush2.bf16.msra.mxu0 0
      %808 = vmatprep.subr.bf16.mxu0 0
      %809 = vmatpush2.bf16.msra.mxu0 0
      %810 = vmatprep.subr.bf16.mxu0 0
      %811 = vmatpush2.bf16.msra.mxu0 0
      %812 = vmatprep.subr.bf16.mxu0 0
      %813 = vmatpush2.bf16.msra.mxu0 0
      %814 = vmatprep.subr.bf16.mxu0 0
      %815 = vmatpush2.bf16.msra.mxu0 0
      %816 = vmatprep.subr.bf16.mxu0 0
      %817 = vmatpush2.bf16.msra.mxu0 0
      %818 = vmatprep.subr.bf16.mxu0 0
      %819 = vmatpush2.bf16.msra.mxu0 0
      %820 = vmatprep.subr.bf16.mxu0 0
      %821 = vmatpush2.bf16.msra.mxu0 0
      %822 = vmatprep.mubr.bf16.mxu0 0
      %823 = vmatmul.mubr.bf16.gmra.mxu0 %v764
      %v824 = vpop.f32.mrf.mxu0
      %v825 = vadd.f32 %v762, %v824
      %v826 = vpop.f32.mrf.mxu0
      %v827 = vpop.f32.mrf.mxu0
      %v828 = vadd.f32 %v762, %v827
      %v829 = vpop.f32.mrf.mxu0
      %830 = vmatprep.mubr.bf16.mxu0 0
      %831 = vmatmul.mubr.bf16.gmra.mxu0 %v767
      %v832 = vpop.f32.mrf.mxu0
      %v833 = vadd.f32 %v762, %v832
      %v834 = vpop.f32.mrf.mxu0
      %v835 = vpop.f32.mrf.mxu0
      %v836 = vadd.f32 %v762, %v835
      %v837 = vpop.f32.mrf.mxu0
      %838 = vmatprep.mubr.bf16.mxu0 0
      %839 = vmatmul.mubr.bf16.gmra.mxu0 %v770
      %v840 = vpop.f32.mrf.mxu0
      %v841 = vadd.f32 %v762, %v840
      %v842 = vpop.f32.mrf.mxu0
      %v843 = vpop.f32.mrf.mxu0
      %v844 = vadd.f32 %v762, %v843
      %v845 = vpop.f32.mrf.mxu0
      %846 = vmatprep.mubr.bf16.mxu0 0
      %847 = vmatmul.mubr.bf16.gmra.mxu0 %v773
      %v848 = vpop.f32.mrf.mxu0
      %v849 = vadd.f32 %v762, %v848
      %v850 = vpop.f32.mrf.mxu0
      %v851 = vpop.f32.mrf.mxu0
      %v852 = vadd.f32 %v762, %v851
      %v853 = vpop.f32.mrf.mxu0
      %854 = vmatprep.mubr.bf16.mxu0 0
      %855 = vmatmul.mubr.bf16.gmra.mxu0 %v776
      %v856 = vpop.f32.mrf.mxu0
      %v857 = vadd.f32 %v762, %v856
      %v858 = vpop.f32.mrf.mxu0
      %v859 = vpop.f32.mrf.mxu0
      %v860 = vadd.f32 %v762, %v859
      %v861 = vpop.f32.mrf.mxu0
      %862 = vmatprep.mubr.bf16.mxu0 0
      %863 = vmatmul.mubr.bf16.gmra.mxu0 %v779
      %v864 = vpop.f32.mrf.mxu0
      %v865 = vadd.f32 %v762, %v864
      %v866 = vpop.f32.mrf.mxu0
      %v867 = vpop.f32.mrf.mxu0
      %v868 = vadd.f32 %v762, %v867
      %v869 = vpop.f32.mrf.mxu0
      %870 = vmatprep.mubr.bf16.mxu0 0
      %871 = vmatmul.mubr.bf16.gmra.mxu0 %v782
      %v872 = vpop.f32.mrf.mxu0
      %v873 = vadd.f32 %v762, %v872
      %v874 = vpop.f32.mrf.mxu0
      %v875 = vpop.f32.mrf.mxu0
      %v876 = vadd.f32 %v762, %v875
      %v877 = vpop.f32.mrf.mxu0
      %878 = vmatprep.mubr.bf16.mxu0 0
      %879 = vmatmul.mubr.bf16.gmra.mxu0 %v785
      %v880 = vpop.f32.mrf.mxu0
      %v881 = vadd.f32 %v762, %v880
      %v882 = vpop.f32.mrf.mxu0
      %v883 = vpop.f32.mrf.mxu0
      %v884 = vadd.f32 %v762, %v883
      %v885 = vpop.f32.mrf.mxu0
      %886 = vdwg.mxu0
      %v887 = vmax.f32 %v825, 0.0
      %v888 = vmax.f32 %v828, 0.0
      %v889 = vmax.f32 %v833, 0.0
      %v890 = vmax.f32 %v836, 0.0
      %v891 = vmax.f32 %v841, 0.0
      %v892 = vmax.f32 %v844, 0.0
      %v893 = vmax.f32 %v849, 0.0
      %v894 = vmax.f32 %v852, 0.0
      %v895 = vmax.f32 %v857, 0.0
      %v896 = vmax.f32 %v860, 0.0
      %v897 = vmax.f32 %v865, 0.0
      %v898 = vmax.f32 %v868, 0.0
      %v899 = vmax.f32 %v873, 0.0
      %v900 = vmax.f32 %v876, 0.0
      %v901 = vmax.f32 %v881, 0.0
      %v902 = vmax.f32 %v884, 0.0
      %v903 = vpack.c.bf16 %v888, %v887
      %v904 = vpack.c.bf16 %v890, %v889
      %v905 = vpack.c.bf16 %v892, %v891
      %v906 = vpack.c.bf16 %v894, %v893
      %v907 = vpack.c.bf16 %v896, %v895
      %v908 = vpack.c.bf16 %v898, %v897
      %v909 = vpack.c.bf16 %v900, %v899
      %v910 = vpack.c.bf16 %v902, %v901
      %v911 = vlaneseq
      %v912 = vshrl.u32 %v911, 7
      %v913 = vsub.s32 0, %v912
      %v914 = vrot.slane %v264, %v913
      %v919 = vunpack.c.l.b16 %v257
      %v920 = vunpack.c.l.b16 %v258
      %v921 = vunpack.c.l.b16 %v259
      %v922 = vunpack.c.l.b16 %v260
      %v923 = vpack.c.b16 %v920, %v919
      %v924 = vpack.c.b16 %v922, %v921
      %v928 = vsel %vm493, %v903, 0
      %v931 = vsel %vm493, %v904, 0
      %v934 = vsel %vm493, %v905, 0
      %v937 = vsel %vm493, %v906, 0
      %v940 = vsel %vm493, %v907, 0
      %v943 = vsel %vm493, %v908, 0
      %v946 = vsel %vm493, %v909, 0
      %v949 = vsel %vm493, %v910, 0
      %951 = vmatprep.subr.bf16.mxu0 0
      %952 = vmatpush1.bf16.msra.mxu0 0
      %953 = vmatprep.subr.bf16.mxu0 0
      %954 = vmatpush1.bf16.msra.mxu0 0
      %955 = vmatprep.subr.bf16.mxu0 0
      %956 = vmatpush1.bf16.msra.mxu0 0
      %957 = vmatprep.subr.bf16.mxu0 0
      %958 = vmatpush1.bf16.msra.mxu0 0
      %959 = vmatprep.subr.bf16.mxu0 0
      %960 = vmatpush1.bf16.msra.mxu0 0
      %961 = vmatprep.subr.bf16.mxu0 0
      %962 = vmatpush1.bf16.msra.mxu0 0
      %963 = vmatprep.subr.bf16.mxu0 0
      %964 = vmatpush1.bf16.msra.mxu0 %v924
      %965 = vmatprep.subr.bf16.mxu0 0
      %966 = vmatpush1.bf16.msra.mxu0 %v923
      %967 = vmatprep.subr.bf16.mxu0 0
      %968 = vmatpush2.bf16.msra.mxu0 0
      %969 = vmatprep.subr.bf16.mxu0 0
      %970 = vmatpush2.bf16.msra.mxu0 0
      %971 = vmatprep.subr.bf16.mxu0 0
      %972 = vmatpush2.bf16.msra.mxu0 0
      %973 = vmatprep.subr.bf16.mxu0 0
      %974 = vmatpush2.bf16.msra.mxu0 0
      %975 = vmatprep.subr.bf16.mxu0 0
      %976 = vmatpush2.bf16.msra.mxu0 0
      %977 = vmatprep.subr.bf16.mxu0 0
      %978 = vmatpush2.bf16.msra.mxu0 0
      %979 = vmatprep.subr.bf16.mxu0 0
      %980 = vmatpush2.bf16.msra.mxu0 0
      %981 = vmatprep.subr.bf16.mxu0 0
      %982 = vmatpush2.bf16.msra.mxu0 0
      %983 = vmatprep.mubr.bf16.mxu0 0
      %984 = vmatmul.mubr.bf16.gmra.mxu0 %v928
      %v985 = vpop.f32.mrf.mxu0
      %v986 = vadd.f32 %v914, %v985
      %v987 = vpop.f32.mrf.mxu0
      %v988 = vpop.f32.mrf.mxu0
      %v989 = vadd.f32 %v914, %v988
      %v990 = vpop.f32.mrf.mxu0
      %991 = vmatprep.mubr.bf16.mxu0 0
      %992 = vmatmul.mubr.bf16.gmra.mxu0 %v931
      %v993 = vpop.f32.mrf.mxu0
      %v994 = vadd.f32 %v914, %v993
      %v995 = vpop.f32.mrf.mxu0
      %v996 = vpop.f32.mrf.mxu0
      %v997 = vadd.f32 %v914, %v996
      %v998 = vpop.f32.mrf.mxu0
      %999 = vmatprep.mubr.bf16.mxu0 0
      %1000 = vmatmul.mubr.bf16.gmra.mxu0 %v934
      %v1001 = vpop.f32.mrf.mxu0
      %v1002 = vadd.f32 %v914, %v1001
      %v1003 = vpop.f32.mrf.mxu0
      %v1004 = vpop.f32.mrf.mxu0
      %v1005 = vadd.f32 %v914, %v1004
      %v1006 = vpop.f32.mrf.mxu0
      %1007 = vmatprep.mubr.bf16.mxu0 0
      %1008 = vmatmul.mubr.bf16.gmra.mxu0 %v937
      %v1009 = vpop.f32.mrf.mxu0
      %v1010 = vadd.f32 %v914, %v1009
      %v1011 = vpop.f32.mrf.mxu0
      %v1012 = vpop.f32.mrf.mxu0
      %v1013 = vadd.f32 %v914, %v1012
      %v1014 = vpop.f32.mrf.mxu0
      %1015 = vmatprep.mubr.bf16.mxu0 0
      %1016 = vmatmul.mubr.bf16.gmra.mxu0 %v940
      %v1017 = vpop.f32.mrf.mxu0
      %v1018 = vadd.f32 %v914, %v1017
      %v1019 = vpop.f32.mrf.mxu0
      %v1020 = vpop.f32.mrf.mxu0
      %v1021 = vadd.f32 %v914, %v1020
      %v1022 = vpop.f32.mrf.mxu0
      %1023 = vmatprep.mubr.bf16.mxu0 0
      %1024 = vmatmul.mubr.bf16.gmra.mxu0 %v943
      %v1025 = vpop.f32.mrf.mxu0
      %v1026 = vadd.f32 %v914, %v1025
      %v1027 = vpop.f32.mrf.mxu0
      %v1028 = vpop.f32.mrf.mxu0
      %v1029 = vadd.f32 %v914, %v1028
      %v1030 = vpop.f32.mrf.mxu0
      %1031 = vmatprep.mubr.bf16.mxu0 0
      %1032 = vmatmul.mubr.bf16.gmra.mxu0 %v946
      %v1033 = vpop.f32.mrf.mxu0
      %v1034 = vadd.f32 %v914, %v1033
      %v1035 = vpop.f32.mrf.mxu0
      %v1036 = vpop.f32.mrf.mxu0
      %v1037 = vadd.f32 %v914, %v1036
      %v1038 = vpop.f32.mrf.mxu0
      %1039 = vmatprep.mubr.bf16.mxu0 0
      %1040 = vmatmul.mubr.bf16.gmra.mxu0 %v949
      %v1041 = vpop.f32.mrf.mxu0
      %v1042 = vadd.f32 %v914, %v1041
      %v1043 = vpop.f32.mrf.mxu0
      %v1044 = vpop.f32.mrf.mxu0
      %v1045 = vadd.f32 %v914, %v1044
      %v1046 = vpop.f32.mrf.mxu0
      %1047 = vdwg.mxu0
      %vm1048 = vcmask 31744
      %1049 = vst.msk [vmem:[%s248] sm:$0xff] %vm1048, %v986
      %1050 = vst.msk [vmem:[%s248 + $0x8] sm:$0xff] %vm1048, %v989
      %1051 = vst.msk [vmem:[%s248 + $0x10] sm:$0xff] %vm1048, %v994
      %1052 = vst.msk [vmem:[%s248 + $0x18] sm:$0xff] %vm1048, %v997
      %1053 = vst.msk [vmem:[%s248 + $0x20] sm:$0xff] %vm1048, %v1002
      %1054 = vst.msk [vmem:[%s248 + $0x28] sm:$0xff] %vm1048, %v1005
      %1055 = vst.msk [vmem:[%s248 + $0x30] sm:$0xff] %vm1048, %v1010
      %1056 = vst.msk [vmem:[%s248 + $0x38] sm:$0xff] %vm1048, %v1013
      %1057 = vst.msk [vmem:[%s248 + $0x40] sm:$0xff] %vm1048, %v1018
      %1058 = vst.msk [vmem:[%s248 + $0x48] sm:$0xff] %vm1048, %v1021
      %1059 = vst.msk [vmem:[%s248 + $0x50] sm:$0xff] %vm1048, %v1026
      %1060 = vst.msk [vmem:[%s248 + $0x58] sm:$0xff] %vm1048, %v1029
      %1061 = vst.msk [vmem:[%s248 + $0x60] sm:$0xff] %vm1048, %v1034
      %1062 = vst.msk [vmem:[%s248 + $0x68] sm:$0xff] %vm1048, %v1037
      %1063 = vst.msk [vmem:[%s248 + $0x70] sm:$0xff] %vm1048, %v1042
      %1064 = vst.msk [vmem:[%s248 + $0x78] sm:$0xff] %vm1048, %v1045
      %s1065 = smul.u32 16, %s16
      %p1066 = scmp.lt.s32.totalorder %s1065, 31
      %s1067 = scalar_select %p1066, %s1065, 31
      %s1068 = smul.addr %s1067, 8
      %s1069 = scalar_lea.vmem %s5, %s1068
      // Predicated region
      $region41: #{tpu_custom_call.1} parent=39 // pred_check
        %p1070 = pneg %p149
      $region42: #{tpu_custom_call.1} parent=39 // pred_check_branch
        %1072 = sbr.rel (%p1070) target = $region44
      $region43: #{tpu_custom_call.1} parent=39 // pred_region
        %s1073 = smul.u32 16, %s16
      $region44: #{tpu_custom_call.1} parent=39 // pred_fallthru
        _
    $region40: #{tpu_custom_call.1} parent=5 // pred_fallthru
      _
    %p1074 = scmp.le.s32.totalorder 2, %s11
    // Predicated region
    $region45: #{tpu_custom_call.1} parent=5 // pred_check
      %p1075 = pneg %p1074
    $region46: #{tpu_custom_call.1} parent=5 // pred_check_branch
      %1077 = sbr.rel (%p1075) target = $region48
    $region47: #{tpu_custom_call.1} parent=5 // pred_region
      %s1078 = ssub.s32 %s11, 2
      // Predicated region
      $region49: #{tpu_custom_call.1} parent=47 // pred_check
        %p1079 = pneg %p155
      $region50: #{tpu_custom_call.1} parent=47 // pred_check_branch
        %1081 = sbr.rel (%p1079) target = $region52
      $region51: #{tpu_custom_call.1} parent=47 // pred_region
        %s1082 = smul.u32 16, %s17
        %p1083 = scmp.lt.s32.totalorder %s1082, 31
        %s1084 = scalar_select %p1083, %s1082, 31
        %s1085 = smul.addr %s1084, 8
        %s1086 = scalar_lea.vmem %s5, %s1085
      $region52: #{tpu_custom_call.1} parent=47 // pred_fallthru
        _
    $region48: #{tpu_custom_call.1} parent=5 // pred_fallthru
      _
  $region6: #{tpu_custom_call.1} parent=0 // loop_footer
    %s15 = sadd.s32 1, %s11
  $region7: #{tpu_custom_call.1} parent=0 // loop_footer_branch
    %10 = sbr.rel target = $region3
  $region8: #{tpu_custom_call.1} parent=0 // loop_exit
    _

</llo_original>
